<compile_context>
chip_gen: v6e
topology: v6e:2x2x1
jax: 0.10.0
libtpu: 0.0.40
codegen_flags: <defaults>
</compile_context>

<pallas_src>
import functools

import jax
import jax.numpy as jnp
from jax.experimental import pallas as pl


@functools.lru_cache(maxsize=None)
def _build_down_sampling_half(H, BWC, operand_dtype_name):
  """Fused both-halves conv(3,1)/stride(2,1)/pad(1,0) + bias + channel concat.

  Kernel operands (lane-dense, batch folded into lanes):
    x:  (H, BWC)          activations, lane = ((b*W + w)*C + c)
    w:  (3*BWC, BWC)      per-tap block-diagonal mixing, taps stacked on K
    b:  (1, BWC)          bias broadcast over output rows
  Output: (Hout, BWC) float32.
  """
  KH, SH = 3, 2
  Hout = (H + 2 - KH) // SH + 1
  operand_dtype = jnp.dtype(operand_dtype_name)

  def kernel(x_ref, w_ref, b_ref, o_ref):
    zero_row = jnp.zeros((1, BWC), operand_dtype)

    # Conv output row h reads padded rows 2h, 2h+1, 2h+2 == input rows
    # 2h-1, 2h, 2h+1.  Only the very first padded row is ever zero padding
    # (for even H the bottom pad row is never read), so padding is a single
    # in-register zero row instead of a zero-filled scratch copy.
    tap1 = x_ref[pl.ds(0, Hout, SH), :]              # input rows 0,2,...,
    if H % 2 == 0:
      odd = x_ref[pl.ds(1, Hout, SH), :]             # input rows 1,3,...,H-1
      tap2 = odd
      prev_odd = odd[:Hout - 1, :]                   # input rows 1,...,H-3
    else:
      prev_odd = x_ref[pl.ds(1, Hout - 1, SH), :]    # input rows 1,...,H-2
      tap2 = jnp.concatenate([prev_odd, zero_row], axis=0)   # bottom pad row
    tap0 = jnp.concatenate([zero_row, prev_odd], axis=0)     # top pad row

    # Single fused MXU matmul over all three taps (K = 3*BWC), f32 accumulate.
    operand = jnp.concatenate([tap0, tap1, tap2], axis=1)    # (Hout, 3*BWC)
    acc = jnp.dot(operand, w_ref[...], preferred_element_type=jnp.float32)
    o_ref[...] = acc + b_ref[...]

  # No grid / no BlockSpecs: single invocation, whole (tiny) arrays in VMEM.
  return pl.pallas_call(
      kernel,
      out_shape=jax.ShapeDtypeStruct((Hout, BWC), jnp.float32),
  )


def down_sampling_half_fwd(x_nchw, w1, b1, w2, b2, *,
                           operand_dtype=jnp.float32):
  """NCHW in / NCHW out; identical semantics to the PyTorch module.

  Set operand_dtype=jnp.bfloat16 on v6e/v7x for native-MXU operands
  (accumulation stays float32).
  """
  B, C, H, W = x_nchw.shape
  Ch = C // 2
  KH, SH = 3, 2
  Hout = (H + 2 - KH) // SH + 1
  BWC = B * W * C

  # Wrapper-side layout plumbing: NCHW -> lane-dense (H, B*W*C),
  # lane index = ((b*W + w)*C + c).
  x = jnp.transpose(x_nchw, (2, 0, 3, 1)).reshape(H, BWC).astype(operand_dtype)

  # Per-tap (C, C) channel-mixing block, block-diagonal over the two halves
  # (the module's grouped structure).  Conv2d weight is (co, ci, kh, 1);
  # cross-correlation => M_k[ci, co] = w[co, ci, k].
  wfull = jnp.zeros((KH, C, C), jnp.float32)
  wfull = wfull.at[:, :Ch, :Ch].set(
      jnp.transpose(w1[:, :, :, 0], (2, 1, 0)).astype(jnp.float32))
  wfull = wfull.at[:, Ch:, Ch:].set(
      jnp.transpose(w2[:, :, :, 0], (2, 1, 0)).astype(jnp.float32))
  # Block-diagonal over the B*W positions -> (KH, BWC, BWC), then stack the
  # taps along K so the kernel does one dense (Hout, 3*BWC) @ (3*BWC, BWC).
  eye_bw = jnp.eye(B * W, dtype=jnp.float32)
  wblk = jnp.einsum("uv,kio->kuivo", eye_bw, wfull).reshape(KH, BWC, BWC)
  wfused = wblk.reshape(KH * BWC, BWC).astype(operand_dtype)

  # Bias laid out to match the output lane layout (b, w, co); kept f32.
  bias = jnp.tile(jnp.concatenate([b1, b2]).astype(jnp.float32), B * W)
  bias = bias.reshape(1, BWC)

  call = _build_down_sampling_half(H, BWC, jnp.dtype(operand_dtype).name)
  o = call(x, wfused, bias)                                  # (Hout, BWC)
  return jnp.transpose(o.reshape(Hout, B, W, C), (1, 3, 0, 2))


if __name__ == "__main__":
  B, in_ch, H, W = 2, 4, 16, 16
  Ch = in_ch // 2
  Hout = (H + 2 - 3) // 2 + 1

  key = jax.random.PRNGKey(0)
  kx, k1, k2, k3, k4 = jax.random.split(key, 5)
  x = jax.random.normal(kx, (B, in_ch, H, W), jnp.float32)
  w1 = jax.random.normal(k1, (Ch, Ch, 3, 1), jnp.float32) * 0.3
  b1 = jax.random.normal(k2, (Ch,), jnp.float32) * 0.1
  w2 = jax.random.normal(k3, (Ch, Ch, 3, 1), jnp.float32) * 0.3
  b2 = jax.random.normal(k4, (Ch,), jnp.float32) * 0.1

  fwd = jax.jit(down_sampling_half_fwd)
  out = jax.block_until_ready(fwd(x, w1, b1, w2, b2))

  # Pure-JAX reference (cross-correlation, same convention as torch.nn.Conv2d).
  def ref(x, w1, b1, w2, b2):
    def conv(xh, w, b):
      y = jax.lax.conv_general_dilated(
          xh, w, window_strides=(2, 1), padding=((1, 1), (0, 0)),
          dimension_numbers=("NCHW", "OIHW", "NCHW"))
      return y + b.reshape(1, -1, 1, 1)
    return jnp.concatenate(
        [conv(x[:, :Ch], w1, b1), conv(x[:, Ch:], w2, b2)], axis=1)

  expect = jax.block_until_ready(ref(x, w1, b1, w2, b2))
  assert out.shape == expect.shape == (B, in_ch, Hout, W), (out.shape,
                                                            expect.shape)
  err = float(jnp.max(jnp.abs(out - expect)))
  assert jnp.allclose(out, expect, rtol=1e-4, atol=1e-4), err
  print("KERNEL_OK")
</pallas_src>

<mosaic_0001>
module attributes {stable_mosaic.version = 11 : i64} {
  func.func @kernel(%arg0: memref<16x128xf32, #tpu.memory_space<vmem>>, %arg1: memref<384x128xf32, #tpu.memory_space<vmem>>, %arg2: memref<1x128xf32, #tpu.memory_space<vmem>>, %arg3: memref<8x128xf32, #tpu.memory_space<vmem>>) attributes {dimension_semantics = [], scalar_prefetch = 0 : i64, scratch_operands = 0 : i64, tpu.core_type = #tpu.core_type<tc>} {
    %cst = arith.constant 0.000000e+00 : f32
    %0 = vector.broadcast %cst : f32 to vector<1x128xf32>
    %c0 = arith.constant 0 : index
    %c0_0 = arith.constant 0 : index
    %1 = tpu.strided_load %arg0[%c0, %c0_0] {strides = array<i32: 2, 1>} : memref<16x128xf32, #tpu.memory_space<vmem>>, vector<8x128xf32>
    %c1 = arith.constant 1 : index
    %c0_1 = arith.constant 0 : index
    %2 = tpu.strided_load %arg0[%c1, %c0_1] {strides = array<i32: 2, 1>} : memref<16x128xf32, #tpu.memory_space<vmem>>, vector<8x128xf32>
    %3 = vector.extract_strided_slice %2 {offsets = [0, 0], sizes = [7, 128], strides = [1, 1]} : vector<8x128xf32> to vector<7x128xf32>
    %4 = tpu.concatenate %0, %3 in 0 : vector<1x128xf32>, vector<7x128xf32> -> vector<8x128xf32>
    %5 = tpu.concatenate %4, %1, %2 in 1 : vector<8x128xf32>, vector<8x128xf32>, vector<8x128xf32> -> vector<8x384xf32>
    %c0_2 = arith.constant 0 : index
    %c0_3 = arith.constant 0 : index
    %6 = vector.load %arg1[%c0_2, %c0_3] : memref<384x128xf32, #tpu.memory_space<vmem>>, vector<384x128xf32>
    %cst_4 = arith.constant dense<0.000000e+00> : vector<8x128xf32>
    %7 = tpu.matmul %5, %6, %cst_4 {dimension_numbers = #tpu.dot_dimension_numbers<[1], [0], [0], [1], [0, 0, 1, 1], [], []>} : vector<8x384xf32>, vector<384x128xf32>, vector<8x128xf32> -> vector<8x128xf32>
    %c0_5 = arith.constant 0 : index
    %c0_6 = arith.constant 0 : index
    %8 = vector.load %arg2[%c0_5, %c0_6] : memref<1x128xf32, #tpu.memory_space<vmem>>, vector<1x128xf32>
    %9 = vector.broadcast %8 : vector<1x128xf32> to vector<8x128xf32>
    %10 = arith.addf %7, %9 : vector<8x128xf32>
    %c0_7 = arith.constant 0 : index
    %c0_8 = arith.constant 0 : index
    %11 = vector.load %arg3[%c0_7, %c0_8] : memref<8x128xf32, #tpu.memory_space<vmem>>, vector<8x128xf32>
    tpu.vector_store %arg3[%c0_7, %c0_8], %10 {strides = array<i32>} : memref<8x128xf32, #tpu.memory_space<vmem>>, vector<8x128xf32>,
    return
  }
}

</mosaic_0001>

<llo_original>
// kernel: tile.8
$region0: #{tile.8}
  #allocation0 [shape = 's32[1]{0}', space=sflag, size = 0x4, scoped, tag = 'scoped memory for tile.8']
  %s0 = inlined_call_operand.vmem [shape: f32[4], index: 0, kind: input, shape index: {}]
  %s1 = inlined_call_operand.vmem [shape: f32[32,4], index: 1, kind: output, shape index: {}]
  // Predicated region
  $region2: #{tile.8} parent=0 // pred_check
    _
  $region3: #{tile.8} parent=0 // pred_check_branch
    %3 = sbr.rel (0) target = $region5
  $region4: #{tile.8} parent=0 // pred_region
    _
  $region5: #{tile.8} parent=0 // pred_fallthru
    _
  %v4 = vld [vmem:[%s0] ss:$0 sm:$0xff]
  %5 = vst [vmem:[%s1] sm:$0xff] %v4
  %s6 = scalar_lea.vmem %s1, 8
  %7 = vst [vmem:[%s6] sm:$0xff] %v4
  %s8 = scalar_lea.vmem %s1, 16
  %9 = vst [vmem:[%s8] sm:$0xff] %v4
  %s10 = scalar_lea.vmem %s1, 24
  %11 = vst [vmem:[%s10] sm:$0xff] %v4

// kernel: tile.9
$region0: #{tile.9}
  %s0 = inlined_call_operand.vmem [shape: f32[32,4], index: 0, kind: input, shape index: {}]
  %s1 = inlined_call_operand.vmem [shape: f32[1,128], index: 1, kind: output, shape index: {}]
  $region1: #{tile.9} parent=0
    #allocation0 [shape = 'u8[4096]{0}', space=vmem, size = 0x1000, scoped, tag = 'scoped mem for output reshape']
    %v2 = vld [vmem:[%s0] sm:$0x1]
    %vm3 = vcmask 31744
    %4 = vst.msk [vmem:[#allocation0] sm:$0x1] %vm3, %v2
    %s5 = scalar_lea.vmem %s0, 31
    %v6 = vld [vmem:[%s5] sm:$0x1]
    %7 = vrot.lane.b32.xlu0 %v6, 124
    %v8 = vpop.permute.xlu0 %7
    %vm9 = vcmask 1048544
    %10 = vst.msk [vmem:[#allocation0] sm:$0x1] %vm9, %v8
    %s11 = scalar_lea.vmem %s0, 30
    %v12 = vld [vmem:[%s11] sm:$0x1]
    %13 = vrot.lane.b32.xlu0 %v12, 120
    %v14 = vpop.permute.xlu0 %13
    %vm15 = vcmask 1015744
    %16 = vst.msk [vmem:[#allocation0] sm:$0x1] %vm15, %v14
    %s17 = scalar_lea.vmem %s0, 29
    %v18 = vld [vmem:[%s17] sm:$0x1]
    %19 = vrot.lane.b32.xlu0 %v18, 116
    %v20 = vpop.permute.xlu0 %19
    %vm21 = vcmask 982944
    %22 = vst.msk [vmem:[#allocation0] sm:$0x1] %vm21, %v20
    %s23 = scalar_lea.vmem %s0, 28
    %v24 = vld [vmem:[%s23] sm:$0x1]
    %25 = vrot.lane.b32.xlu0 %v24, 112
    %v26 = vpop.permute.xlu0 %25
    %vm27 = vcmask 950144
    %28 = vst.msk [vmem:[#allocation0] sm:$0x1] %vm27, %v26
    %s29 = scalar_lea.vmem %s0, 27
    %v30 = vld [vmem:[%s29] sm:$0x1]
    %31 = vrot.lane.b32.xlu0 %v30, 108
    %v32 = vpop.permute.xlu0 %31
    %vm33 = vcmask 917344
    %34 = vst.msk [vmem:[#allocation0] sm:$0x1] %vm33, %v32
    %s35 = scalar_lea.vmem %s0, 26
    %v36 = vld [vmem:[%s35] sm:$0x1]
    %37 = vrot.lane.b32.xlu0 %v36, 104
    %v38 = vpop.permute.xlu0 %37
    %vm39 = vcmask 884544
    %40 = vst.msk [vmem:[#allocation0] sm:$0x1] %vm39, %v38
    %s41 = scalar_lea.vmem %s0, 25
    %v42 = vld [vmem:[%s41] sm:$0x1]
    %43 = vrot.lane.b32.xlu0 %v42, 100
    %v44 = vpop.permute.xlu0 %43
    %vm45 = vcmask 851744
    %46 = vst.msk [vmem:[#allocation0] sm:$0x1] %vm45, %v44
    %s47 = scalar_lea.vmem %s0, 24
    %v48 = vld [vmem:[%s47] sm:$0x1]
    %49 = vrot.lane.b32.xlu0 %v48, 96
    %v50 = vpop.permute.xlu0 %49
    %vm51 = vcmask 818944
    %52 = vst.msk [vmem:[#allocation0] sm:$0x1] %vm51, %v50
    %s53 = scalar_lea.vmem %s0, 23
    %v54 = vld [vmem:[%s53] sm:$0x1]
    %55 = vrot.lane.b32.xlu0 %v54, 92
    %v56 = vpop.permute.xlu0 %55
    %vm57 = vcmask 786144
    %58 = vst.msk [vmem:[#allocation0] sm:$0x1] %vm57, %v56
    %s59 = scalar_lea.vmem %s0, 22
    %v60 = vld [vmem:[%s59] sm:$0x1]
    %61 = vrot.lane.b32.xlu0 %v60, 88
    %v62 = vpop.permute.xlu0 %61
    %vm63 = vcmask 753344
    %64 = vst.msk [vmem:[#allocation0] sm:$0x1] %vm63, %v62
    %s65 = scalar_lea.vmem %s0, 21
    %v66 = vld [vmem:[%s65] sm:$0x1]
    %67 = vrot.lane.b32.xlu0 %v66, 84
    %v68 = vpop.permute.xlu0 %67
    %vm69 = vcmask 720544
    %70 = vst.msk [vmem:[#allocation0] sm:$0x1] %vm69, %v68
    %s71 = scalar_lea.vmem %s0, 20
    %v72 = vld [vmem:[%s71] sm:$0x1]
    %73 = vrot.lane.b32.xlu0 %v72, 80
    %v74 = vpop.permute.xlu0 %73
    %vm75 = vcmask 687744
    %76 = vst.msk [vmem:[#allocation0] sm:$0x1] %vm75, %v74
    %s77 = scalar_lea.vmem %s0, 19
    %v78 = vld [vmem:[%s77] sm:$0x1]
    %79 = vrot.lane.b32.xlu0 %v78, 76
    %v80 = vpop.permute.xlu0 %79
    %vm81 = vcmask 654944
    %82 = vst.msk [vmem:[#allocation0] sm:$0x1] %vm81, %v80
    %s83 = scalar_lea.vmem %s0, 18
    %v84 = vld [vmem:[%s83] sm:$0x1]
    %85 = vrot.lane.b32.xlu0 %v84, 72
    %v86 = vpop.permute.xlu0 %85
    %vm87 = vcmask 622144
    %88 = vst.msk [vmem:[#allocation0] sm:$0x1] %vm87, %v86
    %s89 = scalar_lea.vmem %s0, 17
    %v90 = vld [vmem:[%s89] sm:$0x1]
    %91 = vrot.lane.b32.xlu0 %v90, 68
    %v92 = vpop.permute.xlu0 %91
    %vm93 = vcmask 589344
    %94 = vst.msk [vmem:[#allocation0] sm:$0x1] %vm93, %v92
    %s95 = scalar_lea.vmem %s0, 16
    %v96 = vld [vmem:[%s95] sm:$0x1]
    %97 = vrot.lane.b32.xlu0 %v96, 64
    %v98 = vpop.permute.xlu0 %97
    %vm99 = vcmask 556544
    %100 = vst.msk [vmem:[#allocation0] sm:$0x1] %vm99, %v98
    %s101 = scalar_lea.vmem %s0, 15
    %v102 = vld [vmem:[%s101] sm:$0x1]
    %103 = vrot.lane.b32.xlu0 %v102, 60
    %v104 = vpop.permute.xlu0 %103
    %vm105 = vcmask 523744
    %106 = vst.msk [vmem:[#allocation0] sm:$0x1] %vm105, %v104
    %s107 = scalar_lea.vmem %s0, 14
    %v108 = vld [vmem:[%s107] sm:$0x1]
    %109 = vrot.lane.b32.xlu0 %v108, 56
    %v110 = vpop.permute.xlu0 %109
    %vm111 = vcmask 490944
    %112 = vst.msk [vmem:[#allocation0] sm:$0x1] %vm111, %v110
    %s113 = scalar_lea.vmem %s0, 13
    %v114 = vld [vmem:[%s113] sm:$0x1]
    %115 = vrot.lane.b32.xlu0 %v114, 52
    %v116 = vpop.permute.xlu0 %115
    %vm117 = vcmask 458144
    %118 = vst.msk [vmem:[#allocation0] sm:$0x1] %vm117, %v116
    %s119 = scalar_lea.vmem %s0, 12
    %v120 = vld [vmem:[%s119] sm:$0x1]
    %121 = vrot.lane.b32.xlu0 %v120, 48
    %v122 = vpop.permute.xlu0 %121
    %vm123 = vcmask 425344
    %124 = vst.msk [vmem:[#allocation0] sm:$0x1] %vm123, %v122
    %s125 = scalar_lea.vmem %s0, 11
    %v126 = vld [vmem:[%s125] sm:$0x1]
    %127 = vrot.lane.b32.xlu0 %v126, 44
    %v128 = vpop.permute.xlu0 %127
    %vm129 = vcmask 392544
    %130 = vst.msk [vmem:[#allocation0] sm:$0x1] %vm129, %v128
    %s131 = scalar_lea.vmem %s0, 10
    %v132 = vld [vmem:[%s131] sm:$0x1]
    %133 = vrot.lane.b32.xlu0 %v132, 40
    %v134 = vpop.permute.xlu0 %133
    %vm135 = vcmask 359744
    %136 = vst.msk [vmem:[#allocation0] sm:$0x1] %vm135, %v134
    %s137 = scalar_lea.vmem %s0, 9
    %v138 = vld [vmem:[%s137] sm:$0x1]
    %139 = vrot.lane.b32.xlu0 %v138, 36
    %v140 = vpop.permute.xlu0 %139
    %vm141 = vcmask 326944
    %142 = vst.msk [vmem:[#allocation0] sm:$0x1] %vm141, %v140
    %s143 = scalar_lea.vmem %s0, 8
    %v144 = vld [vmem:[%s143] sm:$0x1]
    %145 = vrot.lane.b32.xlu0 %v144, 32
    %v146 = vpop.permute.xlu0 %145
    %vm147 = vcmask 294144
    %148 = vst.msk [vmem:[#allocation0] sm:$0x1] %vm147, %v146
    %s149 = scalar_lea.vmem %s0, 7
    %v150 = vld [vmem:[%s149] sm:$0x1]
    %151 = vrot.lane.b32.xlu0 %v150, 28
    %v152 = vpop.permute.xlu0 %151
    %vm153 = vcmask 261344
    %154 = vst.msk [vmem:[#allocation0] sm:$0x1] %vm153, %v152
    %s155 = scalar_lea.vmem %s0, 6
    %v156 = vld [vmem:[%s155] sm:$0x1]
    %157 = vrot.lane.b32.xlu0 %v156, 24
    %v158 = vpop.permute.xlu0 %157
    %vm159 = vcmask 228544
    %160 = vst.msk [vmem:[#allocation0] sm:$0x1] %vm159, %v158
    %s161 = scalar_lea.vmem %s0, 5
    %v162 = vld [vmem:[%s161] sm:$0x1]
    %163 = vrot.lane.b32.xlu0 %v162, 20
    %v164 = vpop.permute.xlu0 %163
    %vm165 = vcmask 195744
    %166 = vst.msk [vmem:[#allocation0] sm:$0x1] %vm165, %v164
    %s167 = scalar_lea.vmem %s0, 4
    %v168 = vld [vmem:[%s167] sm:$0x1]
    %169 = vrot.lane.b32.xlu0 %v168, 16
    %v170 = vpop.permute.xlu0 %169
    %vm171 = vcmask 162944
    %172 = vst.msk [vmem:[#allocation0] sm:$0x1] %vm171, %v170
    %s173 = scalar_lea.vmem %s0, 3
    %v174 = vld [vmem:[%s173] sm:$0x1]
    %175 = vrot.lane.b32.xlu0 %v174, 12
    %v176 = vpop.permute.xlu0 %175
    %vm177 = vcmask 130144
    %178 = vst.msk [vmem:[#allocation0] sm:$0x1] %vm177, %v176
    %s179 = scalar_lea.vmem %s0, 2
    %v180 = vld [vmem:[%s179] sm:$0x1]
    %181 = vrot.lane.b32.xlu0 %v180, 8
    %v182 = vpop.permute.xlu0 %181
    %vm183 = vcmask 97344
    %184 = vst.msk [vmem:[#allocation0] sm:$0x1] %vm183, %v182
    %s185 = scalar_lea.vmem %s0, 1
    %v186 = vld [vmem:[%s185] sm:$0x1]
    %187 = vrot.lane.b32.xlu0 %v186, 4
    %v188 = vpop.permute.xlu0 %187
    %vm189 = vcmask 64544
    %190 = vst.msk [vmem:[#allocation0] sm:$0x1] %vm189, %v188
    %s192 = sshll.u32 1, 1
    %s193 = ssub.s32 %s192, 1
    %v195 = vld [vmem:[#allocation0] sm:%s193]
    %s196 = sshll.u32 1, 1
    %s197 = ssub.s32 %s196, 1
    %198 = vst [vmem:[%s1] sm:%s197] %v195

// kernel: down_sampling_half_fwd.1
$region0: #{down_sampling_half_fwd.1}
  #allocation0 [shape = 'u32[]', space=smem, size = 0x4, offset = 0x4, fixed_abs, tag = 'smem constant byte address 0x4 - core index']
  #allocation1 [shape = 'u32[144,128]{1,0:T(1,128)}', space=vmem, size = 0x12000, scoped, tag = 'internal scratch']
  %s0 = inlined_call_operand.vmem [shape: f32[16,128], index: 0, kind: input, shape index: {}]
  %s1 = inlined_call_operand.vmem [shape: f32[384,128], index: 1, kind: input, shape index: {}]
  %s2 = inlined_call_operand.vmem [shape: f32[1,128], index: 2, kind: input, shape index: {}]
  %s3 = inlined_call_operand.vmem [shape: f32[8,128], index: 3, kind: output, shape index: {}]
  %s4 = sld [smem:[#allocation0]]
  $region22: #{down_sampling_half_fwd.1} parent=0
    _
  %s6 = ssub.s32 1, %s4
  %s7 = scalar_select 0, %s6, %s4
  // Predicated region
  $region2: #{down_sampling_half_fwd.1} parent=0 // pred_check
    _
  $region3: #{down_sampling_half_fwd.1} parent=0 // pred_check_branch
    %9 = sbr.rel (0) target = $region5
  $region4: #{down_sampling_half_fwd.1} parent=0 // pred_region
    _
  $region5: #{down_sampling_half_fwd.1} parent=0 // pred_fallthru
    _
  // Predicated region
  $region6: #{down_sampling_half_fwd.1} parent=0 // pred_check
    _
  $region7: #{down_sampling_half_fwd.1} parent=0 // pred_check_branch
    %11 = sbr.rel (0) target = $region9
  $region8: #{down_sampling_half_fwd.1} parent=0 // pred_region
    _
  $region9: #{down_sampling_half_fwd.1} parent=0 // pred_fallthru
    _
  // Predicated region
  $region10: #{down_sampling_half_fwd.1} parent=0 // pred_check
    _
  $region11: #{down_sampling_half_fwd.1} parent=0 // pred_check_branch
    %13 = sbr.rel (0) target = $region13
  $region12: #{down_sampling_half_fwd.1} parent=0 // pred_region
    _
  $region13: #{down_sampling_half_fwd.1} parent=0 // pred_fallthru
    _
  %v14 = vld [vmem:[%s0] ss:$2 sm:$0xff]
  %s15 = scalar_lea.vmem %s0, 1
  %v16 = vld [vmem:[%s15] ss:$2 sm:$0xff]
  %v18 = vrot.slane %v16, 7
  %vm20 = vcmask 1040384
  %v21 = vsel %vm20, 0.0, %v18
  %v22 = vld [vmem:[%s1] sm:$0xff]
  %v23 = vld [vmem:[%s1 + $0x8] sm:$0xff]
  %v24 = vld [vmem:[%s1 + $0x10] sm:$0xff]
  %v25 = vld [vmem:[%s1 + $0x18] sm:$0xff]
  %v26 = vld [vmem:[%s1 + $0x20] sm:$0xff]
  %v27 = vld [vmem:[%s1 + $0x28] sm:$0xff]
  %v28 = vld [vmem:[%s1 + $0x30] sm:$0xff]
  %v29 = vld [vmem:[%s1 + $0x38] sm:$0xff]
  %v30 = vld [vmem:[%s1 + $0x40] sm:$0xff]
  %v31 = vld [vmem:[%s1 + $0x48] sm:$0xff]
  %v32 = vld [vmem:[%s1 + $0x50] sm:$0xff]
  %v33 = vld [vmem:[%s1 + $0x58] sm:$0xff]
  %v34 = vld [vmem:[%s1 + $0x60] sm:$0xff]
  %v35 = vld [vmem:[%s1 + $0x68] sm:$0xff]
  %v36 = vld [vmem:[%s1 + $0x70] sm:$0xff]
  %v37 = vld [vmem:[%s1 + $0x78] sm:$0xff]
  %v38 = vld [vmem:[%s1 + $0x80] sm:$0xff]
  %v39 = vld [vmem:[%s1 + $0x88] sm:$0xff]
  %v40 = vld [vmem:[%s1 + $0x90] sm:$0xff]
  %v41 = vld [vmem:[%s1 + $0x98] sm:$0xff]
  %v42 = vld [vmem:[%s1 + $0xa0] sm:$0xff]
  %v43 = vld [vmem:[%s1 + $0xa8] sm:$0xff]
  %v44 = vld [vmem:[%s1 + $0xb0] sm:$0xff]
  %v45 = vld [vmem:[%s1 + $0xb8] sm:$0xff]
  %v46 = vld [vmem:[%s1 + $0xc0] sm:$0xff]
  %v47 = vld [vmem:[%s1 + $0xc8] sm:$0xff]
  %v48 = vld [vmem:[%s1 + $0xd0] sm:$0xff]
  %v49 = vld [vmem:[%s1 + $0xd8] sm:$0xff]
  %v50 = vld [vmem:[%s1 + $0xe0] sm:$0xff]
  %v51 = vld [vmem:[%s1 + $0xe8] sm:$0xff]
  %v52 = vld [vmem:[%s1 + $0xf0] sm:$0xff]
  %v53 = vld [vmem:[%s1 + $0xf8] sm:$0xff]
  %v54 = vld [vmem:[%s1 + $0x100] sm:$0xff]
  %v55 = vld [vmem:[%s1 + $0x108] sm:$0xff]
  %v56 = vld [vmem:[%s1 + $0x110] sm:$0xff]
  %v57 = vld [vmem:[%s1 + $0x118] sm:$0xff]
  %v58 = vld [vmem:[%s1 + $0x120] sm:$0xff]
  %v59 = vld [vmem:[%s1 + $0x128] sm:$0xff]
  %v60 = vld [vmem:[%s1 + $0x130] sm:$0xff]
  %v61 = vld [vmem:[%s1 + $0x138] sm:$0xff]
  %v62 = vld [vmem:[%s1 + $0x140] sm:$0xff]
  %v63 = vld [vmem:[%s1 + $0x148] sm:$0xff]
  %v64 = vld [vmem:[%s1 + $0x150] sm:$0xff]
  %v65 = vld [vmem:[%s1 + $0x158] sm:$0xff]
  %v66 = vld [vmem:[%s1 + $0x160] sm:$0xff]
  %v67 = vld [vmem:[%s1 + $0x168] sm:$0xff]
  %v68 = vld [vmem:[%s1 + $0x170] sm:$0xff]
  %v69 = vld [vmem:[%s1 + $0x178] sm:$0xff]
  %v70 = vld [vmem:[%s2] sm:$0x1]
  %v72 = vlaneseq
  %v73 = vshrl.u32 %v72, 7
  %v74 = vsub.s32 0, %v73
  %v75 = vrot.slane %v70, %v74
  %77 = vmatprep.subr.mxu0 0.0
  %78 = vmatpush1.msra.mxu0 %v37
  %79 = vmatprep.subr.mxu0 0.0
  %80 = vmatpush1.msra.mxu0 %v36
  %81 = vmatprep.subr.mxu0 0.0
  %82 = vmatpush1.msra.mxu0 %v35
  %83 = vmatprep.subr.mxu0 0.0
  %84 = vmatpush1.msra.mxu0 %v34
  %85 = vmatprep.subr.mxu0 0.0
  %86 = vmatpush1.msra.mxu0 %v33
  %87 = vmatprep.subr.mxu0 0.0
  %88 = vmatpush1.msra.mxu0 %v32
  %89 = vmatprep.subr.mxu0 0.0
  %90 = vmatpush1.msra.mxu0 %v31
  %91 = vmatprep.subr.mxu0 0.0
  %92 = vmatpush1.msra.mxu0 %v30
  %93 = vmatprep.subr.mxu0 0.0
  %94 = vmatpush1.msra.mxu0 %v29
  %95 = vmatprep.subr.mxu0 0.0
  %96 = vmatpush1.msra.mxu0 %v28
  %97 = vmatprep.subr.mxu0 0.0
  %98 = vmatpush1.msra.mxu0 %v27
  %99 = vmatprep.subr.mxu0 0.0
  %100 = vmatpush1.msra.mxu0 %v26
  %101 = vmatprep.subr.mxu0 0.0
  %102 = vmatpush1.msra.mxu0 %v25
  %103 = vmatprep.subr.mxu0 0.0
  %104 = vmatpush1.msra.mxu0 %v24
  %105 = vmatprep.subr.mxu0 0.0
  %106 = vmatpush1.msra.mxu0 %v23
  %107 = vmatprep.subr.mxu0 0.0
  %108 = vmatpush1.msra.mxu0 %v22
  %109 = vmatprep.subr.mxu0 0.0
  %110 = vmatpush2.msra.mxu0 %v53
  %111 = vmatprep.subr.mxu0 0.0
  %112 = vmatpush2.msra.mxu0 %v52
  %113 = vmatprep.subr.mxu0 0.0
  %114 = vmatpush2.msra.mxu0 %v51
  %115 = vmatprep.subr.mxu0 0.0
  %116 = vmatpush2.msra.mxu0 %v50
  %117 = vmatprep.subr.mxu0 0.0
  %118 = vmatpush2.msra.mxu0 %v49
  %119 = vmatprep.subr.mxu0 0.0
  %120 = vmatpush2.msra.mxu0 %v48
  %121 = vmatprep.subr.mxu0 0.0
  %122 = vmatpush2.msra.mxu0 %v47
  %123 = vmatprep.subr.mxu0 0.0
  %124 = vmatpush2.msra.mxu0 %v46
  %125 = vmatprep.subr.mxu0 0.0
  %126 = vmatpush2.msra.mxu0 %v45
  %127 = vmatprep.subr.mxu0 0.0
  %128 = vmatpush2.msra.mxu0 %v44
  %129 = vmatprep.subr.mxu0 0.0
  %130 = vmatpush2.msra.mxu0 %v43
  %131 = vmatprep.subr.mxu0 0.0
  %132 = vmatpush2.msra.mxu0 %v42
  %133 = vmatprep.subr.mxu0 0.0
  %134 = vmatpush2.msra.mxu0 %v41
  %135 = vmatprep.subr.mxu0 0.0
  %136 = vmatpush2.msra.mxu0 %v40
  %137 = vmatprep.subr.mxu0 0.0
  %138 = vmatpush2.msra.mxu0 %v39
  %139 = vmatprep.subr.mxu0 0.0
  %140 = vmatpush2.msra.mxu0 %v38
  %141 = vmatprep.mubr.f32.mxu0 %v14
  %142 = vmatmul.mubr.f32.gmra.mxu0 %v21
  %v143 = vpop.f32.mrf.mxu0
  %v144 = vadd.f32 %v75, %v143
  %v145 = vpop.f32.mrf.mxu0
  %146 = vdwg.mxu0
  %147 = vmatprep.subr.mxu0 0.0
  %148 = vmatpush1.msra.mxu0 %v69
  %149 = vmatprep.subr.mxu0 0.0
  %150 = vmatpush1.msra.mxu0 %v68
  %151 = vmatprep.subr.mxu0 0.0
  %152 = vmatpush1.msra.mxu0 %v67
  %153 = vmatprep.subr.mxu0 0.0
  %154 = vmatpush1.msra.mxu0 %v66
  %155 = vmatprep.subr.mxu0 0.0
  %156 = vmatpush1.msra.mxu0 %v65
  %157 = vmatprep.subr.mxu0 0.0
  %158 = vmatpush1.msra.mxu0 %v64
  %159 = vmatprep.subr.mxu0 0.0
  %160 = vmatpush1.msra.mxu0 %v63
  %161 = vmatprep.subr.mxu0 0.0
  %162 = vmatpush1.msra.mxu0 %v62
  %163 = vmatprep.subr.mxu0 0.0
  %164 = vmatpush1.msra.mxu0 %v61
  %165 = vmatprep.subr.mxu0 0.0
  %166 = vmatpush1.msra.mxu0 %v60
  %167 = vmatprep.subr.mxu0 0.0
  %168 = vmatpush1.msra.mxu0 %v59
  %169 = vmatprep.subr.mxu0 0.0
  %170 = vmatpush1.msra.mxu0 %v58
  %171 = vmatprep.subr.mxu0 0.0
  %172 = vmatpush1.msra.mxu0 %v57
  %173 = vmatprep.subr.mxu0 0.0
  %174 = vmatpush1.msra.mxu0 %v56
  %175 = vmatprep.subr.mxu0 0.0
  %176 = vmatpush1.msra.mxu0 %v55
  %177 = vmatprep.subr.mxu0 0.0
  %178 = vmatpush1.msra.mxu0 %v54
  %179 = vmatprep.subr.mxu0 0.0
  %180 = vmatpush2.msra.mxu0 0.0
  %181 = vmatprep.subr.mxu0 0.0
  %182 = vmatpush2.msra.mxu0 0.0
  %183 = vmatprep.subr.mxu0 0.0
  %184 = vmatpush2.msra.mxu0 0.0
  %185 = vmatprep.subr.mxu0 0.0
  %186 = vmatpush2.msra.mxu0 0.0
  %187 = vmatprep.subr.mxu0 0.0
  %188 = vmatpush2.msra.mxu0 0.0
  %189 = vmatprep.subr.mxu0 0.0
  %190 = vmatpush2.msra.mxu0 0.0
  %191 = vmatprep.subr.mxu0 0.0
  %192 = vmatpush2.msra.mxu0 0.0
  %193 = vmatprep.subr.mxu0 0.0
  %194 = vmatpush2.msra.mxu0 0.0
  %195 = vmatprep.subr.mxu0 0.0
  %196 = vmatpush2.msra.mxu0 0.0
  %197 = vmatprep.subr.mxu0 0.0
  %198 = vmatpush2.msra.mxu0 0.0
  %199 = vmatprep.subr.mxu0 0.0
  %200 = vmatpush2.msra.mxu0 0.0
  %201 = vmatprep.subr.mxu0 0.0
  %202 = vmatpush2.msra.mxu0 0.0
  %203 = vmatprep.subr.mxu0 0.0
  %204 = vmatpush2.msra.mxu0 0.0
  %205 = vmatprep.subr.mxu0 0.0
  %206 = vmatpush2.msra.mxu0 0.0
  %207 = vmatprep.subr.mxu0 0.0
  %208 = vmatpush2.msra.mxu0 0.0
  %209 = vmatprep.subr.mxu0 0.0
  %210 = vmatpush2.msra.mxu0 0.0
  %211 = vmatprep.mubr.f32.mxu0 0.0
  %212 = vmatmul.mubr.f32.gmra.mxu0 %v16
  %v213 = vpop.f32.mrf.mxu0
  %v214 = vadd.f32 %v144, %v213
  %v215 = vpop.f32.mrf.mxu0
  %216 = vdwg.mxu0
  %217 = vst [vmem:[%s3] sm:$0xff] %v214
  // Predicated region
  $region14: #{down_sampling_half_fwd.1} parent=0 // pred_check
    _
  $region15: #{down_sampling_half_fwd.1} parent=0 // pred_check_branch
    %219 = sbr.rel (0) target = $region17
  $region16: #{down_sampling_half_fwd.1} parent=0 // pred_region
    _
  $region17: #{down_sampling_half_fwd.1} parent=0 // pred_fallthru
    _
  // Predicated region
  $region18: #{down_sampling_half_fwd.1} parent=0 // pred_check
    _
  $region19: #{down_sampling_half_fwd.1} parent=0 // pred_check_branch
    %221 = sbr.rel (0) target = $region21
  $region20: #{down_sampling_half_fwd.1} parent=0 // pred_region
    _
  $region21: #{down_sampling_half_fwd.1} parent=0 // pred_fallthru
    _

</llo_original>
